<compile_context>
chip_gen: v6e
topology: v6e:2x2x1
jax: 0.10.0
libtpu: 0.0.40
codegen_flags: <defaults>
</compile_context>

<pallas_src>
import functools

import jax
import jax.numpy as jnp
from jax import lax
from jax.experimental import pallas as pl
from jax.experimental.pallas import tpu as pltpu

KH = KW = 5
PAD = 2
BN_EPS = 1e-5
LANE = 128
HALF = 64            # lanes allotted to each of {conv2-out, linear-out}
OUT_W = 2 * HALF     # fused, lane-dense 128-wide output slab


def _round_up(x, m):
    return (x + m - 1) // m * m


def _bn_relu(y, gamma, beta):
    """Train-mode BatchNorm (batch stats, biased variance) + ReLU, all f32.

    Two-pass variance (subtract mean first) for numerical stability.
    y: (N, Cp) f32; gamma/beta: (1, Cp) f32, zero in padded lanes so padded
    channels come out exactly zero."""
    mean = jnp.mean(y, axis=0, keepdims=True)
    d = y - mean
    var = jnp.mean(d * d, axis=0, keepdims=True)
    inv_std = lax.rsqrt(var + BN_EPS)
    return jnp.maximum(d * (inv_std * gamma) + beta, 0.0)


def _r_kernel(x_ref, w_ref, p_ref, out_ref):
    """x_ref: (N, Cp) bf16/f32 activations.
    w_ref: (Cp, 2*Cp + 128) matmul-dtype weight slab = w0 || w1 || (w2|wl).
    p_ref: (8, Cp) f32 param slab, rows: g0, b0, g1, b1, (b2|bl), 0, 0, 0.
    out_ref: (N, 128) f32 fused conv2/linear output."""
    cp = x_ref.shape[1]
    mm_dtype = w_ref.dtype

    p = p_ref[...]
    g0, b0 = p[0:1, :], p[1:2, :]
    g1, b1 = p[2:3, :], p[3:4, :]
    b2l = p[4:5, :OUT_W]

    # conv0 (centre tap) -> bn0 -> relu
    y0 = jnp.dot(x_ref[...], w_ref[:, :cp], preferred_element_type=jnp.float32)
    x0 = _bn_relu(y0, g0, b0)

    # conv1 (centre tap) -> bn1 -> relu
    y1 = jnp.dot(x0.astype(mm_dtype), w_ref[:, cp:2 * cp],
                 preferred_element_type=jnp.float32)
    x1 = _bn_relu(y1, g1, b1)

    # fused conv2(+bias) and linear(+bias): one 128-wide MXU tile, one
    # lane-dense unmasked store.
    out = jnp.dot(x1.astype(mm_dtype), w_ref[:, 2 * cp:],
                  preferred_element_type=jnp.float32) + b2l
    out_ref[...] = out.astype(out_ref.dtype)


def prepare_params(params, matmul_dtype=jnp.bfloat16):
    """One-time packing of the PyTorch OIHW / vector params into two slabs."""
    C = params["w0"].shape[0]
    G = params["w2"].shape[0]
    assert G <= HALF, "fused output layout assumes groups <= 64"
    Cp = _round_up(C, LANE)

    def center_tap(w, cout_p):
        # OIHW 5x5 -> centre tap (Cin, Cout), zero-padded to (Cp, cout_p)
        wc = jnp.transpose(w[:, :, PAD, PAD]).astype(jnp.float32)
        return jnp.pad(wc, ((0, Cp - wc.shape[0]), (0, cout_p - wc.shape[1])))

    def pad_row(v, width):
        return jnp.pad(v.astype(jnp.float32), (0, width - v.shape[0]))

    w0c = center_tap(params["w0"], Cp)                       # (Cp, Cp)
    w1c = center_tap(params["w1"], Cp)                       # (Cp, Cp)
    w2c = center_tap(params["w2"], HALF)                     # (Cp, 64)
    wl = jnp.pad(jnp.transpose(params["wl"]).astype(jnp.float32),
                 ((0, Cp - C), (0, HALF - G)))               # (Cp, 64)
    w_slab = jnp.concatenate([w0c, w1c, w2c, wl],
                             axis=1).astype(matmul_dtype)    # (Cp, 2*Cp + 128)

    b2l = jnp.concatenate([pad_row(params["b2"], HALF),
                           pad_row(params["bl"], HALF)])     # (128,)
    p_slab = jnp.stack([
        pad_row(params["g0"], Cp), pad_row(params["b0"], Cp),
        pad_row(params["g1"], Cp), pad_row(params["b1"], Cp),
        jnp.pad(b2l, (0, Cp - OUT_W)),
        jnp.zeros((Cp,), jnp.float32),
        jnp.zeros((Cp,), jnp.float32),
        jnp.zeros((Cp,), jnp.float32)], axis=0)              # (8, Cp) f32

    return {"w": w_slab, "p": p_slab, "C": C, "Cp": Cp, "G": G,
            "mm_dtype": matmul_dtype}


def r_forward(x_nchw, packed):
    """Per-call path: only reshape/pad/cast the activations, then one pallas_call."""
    N, C, H, W = x_nchw.shape
    assert H * W == 1, (
        "nn.Linear(num_features, groups) after Flatten(start_dim=1) requires H*W == 1")
    assert C == packed["C"]
    assert N > 1, "torch train-mode BatchNorm requires more than one batch element"
    Cp, G = packed["Cp"], packed["G"]

    x2d = jnp.pad(x_nchw.reshape(N, C).astype(jnp.float32),
                  ((0, 0), (0, Cp - C))).astype(packed["mm_dtype"])

    vmem = pl.BlockSpec(memory_space=pltpu.MemorySpace.VMEM)
    out = pl.pallas_call(
        _r_kernel,
        out_shape=jax.ShapeDtypeStruct((N, OUT_W), jnp.float32),
        in_specs=[vmem, vmem, vmem],
        out_specs=vmem,
    )(x2d, packed["w"], packed["p"])

    x2 = out[:, :G].reshape(N, G, H, W)       # NCHW like PyTorch (H = W = 1)
    cls = out[:, HALF:HALF + G]               # (N, groups)
    return x2, cls


def r_forward_ref(x, params):
    """Plain-JAX reference (mirrors the torch forward) for validation."""
    def conv(x, w, b=None):
        y = lax.conv_general_dilated(
            x, w, window_strides=(1, 1), padding=((PAD, PAD), (PAD, PAD)),
            dimension_numbers=("NCHW", "OIHW", "NCHW"))
        if b is not None:
            y = y + b[None, :, None, None]
        return y

    def bn_relu(y, g, b):
        mean = jnp.mean(y, axis=(0, 2, 3), keepdims=True)
        var = jnp.mean(jnp.square(y - mean), axis=(0, 2, 3), keepdims=True)
        y_hat = (y - mean) / jnp.sqrt(var + BN_EPS)
        return jnp.maximum(
            y_hat * g[None, :, None, None] + b[None, :, None, None], 0.0)

    x0 = bn_relu(conv(x, params["w0"]), params["g0"], params["b0"])
    x1 = bn_relu(conv(x0, params["w1"]), params["g1"], params["b1"])
    x2 = conv(x1, params["w2"], params["b2"])
    cls = x1.reshape(x1.shape[0], -1) @ params["wl"].T + params["bl"]
    return x2, cls


if __name__ == "__main__":
    # Module hyper-parameters (args.groups, block_channel as in the repo).
    block_channel = [64, 128, 256, 512]          # num_features = 64 + 512//32 = 80
    groups = 8                                   # args.groups
    C = 64 + block_channel[3] // 32
    G = groups
    N, H, W = 8, 1, 1   # H = W = 1 is required by Flatten + Linear(num_features, groups)

    key = jax.random.PRNGKey(0)
    ks = jax.random.split(key, 12)
    params = {
        "w0": 0.05 * jax.random.normal(ks[0], (C, C, KH, KW), jnp.float32),
        "g0": 1.0 + 0.1 * jax.random.normal(ks[1], (C,), jnp.float32),
        "b0": 0.1 * jax.random.normal(ks[2], (C,), jnp.float32),
        "w1": 0.05 * jax.random.normal(ks[3], (C, C, KH, KW), jnp.float32),
        "g1": 1.0 + 0.1 * jax.random.normal(ks[4], (C,), jnp.float32),
        "b1": 0.1 * jax.random.normal(ks[5], (C,), jnp.float32),
        "w2": 0.05 * jax.random.normal(ks[6], (G, C, KH, KW), jnp.float32),
        "b2": 0.1 * jax.random.normal(ks[7], (G,), jnp.float32),
        "wl": 0.1 * jax.random.normal(ks[8], (G, C), jnp.float32),
        "bl": 0.1 * jax.random.normal(ks[9], (G,), jnp.float32),
    }
    x = jax.random.normal(ks[10], (N, C, H, W), jnp.float32)

    x2_ref, cls_ref = r_forward_ref(x, params)

    # f32 MXU-operand path: bitwise-comparable to the plain-JAX reference.
    packed_f32 = jax.tree_util.tree_map(
        lambda a: a, prepare_params(params, jnp.float32))
    fwd_f32 = jax.jit(functools.partial(r_forward, packed=packed_f32))
    x2_f, cls_f = fwd_f32(x)
    jax.block_until_ready((x2_f, cls_f))
    assert x2_f.shape == (N, G, H, W) and cls_f.shape == (N, G)
    assert jnp.allclose(x2_f, x2_ref, atol=1e-3, rtol=1e-3), "x2 (f32) mismatch"
    assert jnp.allclose(cls_f, cls_ref, atol=1e-3, rtol=1e-3), "cls (f32) mismatch"

    # bf16 MXU-operand path (default, recommended on v5e/v6e/v7x): looser
    # tolerance reflects bf16 mantissa, BN math is still f32.
    packed_bf16 = prepare_params(params, jnp.bfloat16)
    fwd_bf16 = jax.jit(functools.partial(r_forward, packed=packed_bf16))
    x2_b, cls_b = fwd_bf16(x)
    jax.block_until_ready((x2_b, cls_b))
    assert jnp.allclose(x2_b, x2_ref, atol=5e-2, rtol=5e-2), "x2 (bf16) mismatch"
    assert jnp.allclose(cls_b, cls_ref, atol=5e-2, rtol=5e-2), "cls (bf16) mismatch"

    print("KERNEL_OK")
</pallas_src>

<mosaic_0001>
module attributes {stable_mosaic.version = 11 : i64} {
  func.func @_r_kernel(%arg0: memref<8x128xf32, #tpu.memory_space<vmem>>, %arg1: memref<128x384xf32, #tpu.memory_space<vmem>>, %arg2: memref<8x128xf32, #tpu.memory_space<vmem>>, %arg3: memref<8x128xf32, #tpu.memory_space<vmem>>) attributes {dimension_semantics = [], scalar_prefetch = 0 : i64, scratch_operands = 0 : i64, tpu.core_type = #tpu.core_type<tc>} {
    %c0 = arith.constant 0 : index
    %c0_0 = arith.constant 0 : index
    %0 = vector.load %arg2[%c0, %c0_0] : memref<8x128xf32, #tpu.memory_space<vmem>>, vector<8x128xf32>
    %1 = vector.extract_strided_slice %0 {offsets = [0, 0], sizes = [1, 128], strides = [1, 1]} : vector<8x128xf32> to vector<1x128xf32>
    %2 = vector.extract_strided_slice %0 {offsets = [1, 0], sizes = [1, 128], strides = [1, 1]} : vector<8x128xf32> to vector<1x128xf32>
    %3 = vector.extract_strided_slice %0 {offsets = [2, 0], sizes = [1, 128], strides = [1, 1]} : vector<8x128xf32> to vector<1x128xf32>
    %4 = vector.extract_strided_slice %0 {offsets = [3, 0], sizes = [1, 128], strides = [1, 1]} : vector<8x128xf32> to vector<1x128xf32>
    %5 = vector.extract_strided_slice %0 {offsets = [4, 0], sizes = [1, 128], strides = [1, 1]} : vector<8x128xf32> to vector<1x128xf32>
    %c0_1 = arith.constant 0 : index
    %c0_2 = arith.constant 0 : index
    %6 = vector.load %arg0[%c0_1, %c0_2] : memref<8x128xf32, #tpu.memory_space<vmem>>, vector<8x128xf32>
    %c0_3 = arith.constant 0 : index
    %c0_4 = arith.constant 0 : index
    %7 = vector.load %arg1[%c0_3, %c0_4] : memref<128x384xf32, #tpu.memory_space<vmem>>, vector<128x128xf32>
    %cst = arith.constant dense<0.000000e+00> : vector<8x128xf32>
    %8 = tpu.matmul %6, %7, %cst {dimension_numbers = #tpu.dot_dimension_numbers<[1], [0], [0], [1], [0, 0, 1, 1], [], []>} : vector<8x128xf32>, vector<128x128xf32>, vector<8x128xf32> -> vector<8x128xf32>
    %cst_5 = arith.constant dense<0.000000e+00> : vector<128xf32>
    %9 = vector.multi_reduction <add>, %8, %cst_5 [0] : vector<8x128xf32> to vector<128xf32>
    %10 = vector.shape_cast %9 : vector<128xf32> to vector<1x128xf32>
    %cst_6 = arith.constant 8.000000e+00 : f32
    %11 = vector.broadcast %cst_6 : f32 to vector<1x128xf32>
    %12 = arith.divf %10, %11 : vector<1x128xf32>
    %13 = vector.broadcast %12 : vector<1x128xf32> to vector<8x128xf32>
    %14 = arith.subf %8, %13 : vector<8x128xf32>
    %15 = arith.mulf %14, %14 : vector<8x128xf32>
    %cst_7 = arith.constant dense<0.000000e+00> : vector<128xf32>
    %16 = vector.multi_reduction <add>, %15, %cst_7 [0] : vector<8x128xf32> to vector<128xf32>
    %17 = vector.shape_cast %16 : vector<128xf32> to vector<1x128xf32>
    %cst_8 = arith.constant 8.000000e+00 : f32
    %18 = vector.broadcast %cst_8 : f32 to vector<1x128xf32>
    %19 = arith.divf %17, %18 : vector<1x128xf32>
    %cst_9 = arith.constant 9.99999974E-6 : f32
    %20 = vector.broadcast %cst_9 : f32 to vector<1x128xf32>
    %21 = arith.addf %19, %20 : vector<1x128xf32>
    %22 = math.rsqrt %21 : vector<1x128xf32>
    %23 = arith.mulf %22, %1 : vector<1x128xf32>
    %24 = vector.broadcast %23 : vector<1x128xf32> to vector<8x128xf32>
    %25 = arith.mulf %14, %24 : vector<8x128xf32>
    %26 = vector.broadcast %2 : vector<1x128xf32> to vector<8x128xf32>
    %27 = arith.addf %25, %26 : vector<8x128xf32>
    %cst_10 = arith.constant 0.000000e+00 : f32
    %28 = vector.broadcast %cst_10 : f32 to vector<8x128xf32>
    %29 = arith.maximumf %27, %28 : vector<8x128xf32>
    %c0_11 = arith.constant 0 : index
    %c128 = arith.constant 128 : index
    %30 = vector.load %arg1[%c0_11, %c128] : memref<128x384xf32, #tpu.memory_space<vmem>>, vector<128x128xf32>
    %cst_12 = arith.constant dense<0.000000e+00> : vector<8x128xf32>
    %31 = tpu.matmul %29, %30, %cst_12 {dimension_numbers = #tpu.dot_dimension_numbers<[1], [0], [0], [1], [0, 0, 1, 1], [], []>} : vector<8x128xf32>, vector<128x128xf32>, vector<8x128xf32> -> vector<8x128xf32>
    %cst_13 = arith.constant dense<0.000000e+00> : vector<128xf32>
    %32 = vector.multi_reduction <add>, %31, %cst_13 [0] : vector<8x128xf32> to vector<128xf32>
    %33 = vector.shape_cast %32 : vector<128xf32> to vector<1x128xf32>
    %cst_14 = arith.constant 8.000000e+00 : f32
    %34 = vector.broadcast %cst_14 : f32 to vector<1x128xf32>
    %35 = arith.divf %33, %34 : vector<1x128xf32>
    %36 = vector.broadcast %35 : vector<1x128xf32> to vector<8x128xf32>
    %37 = arith.subf %31, %36 : vector<8x128xf32>
    %38 = arith.mulf %37, %37 : vector<8x128xf32>
    %cst_15 = arith.constant dense<0.000000e+00> : vector<128xf32>
    %39 = vector.multi_reduction <add>, %38, %cst_15 [0] : vector<8x128xf32> to vector<128xf32>
    %40 = vector.shape_cast %39 : vector<128xf32> to vector<1x128xf32>
    %cst_16 = arith.constant 8.000000e+00 : f32
    %41 = vector.broadcast %cst_16 : f32 to vector<1x128xf32>
    %42 = arith.divf %40, %41 : vector<1x128xf32>
    %cst_17 = arith.constant 9.99999974E-6 : f32
    %43 = vector.broadcast %cst_17 : f32 to vector<1x128xf32>
    %44 = arith.addf %42, %43 : vector<1x128xf32>
    %45 = math.rsqrt %44 : vector<1x128xf32>
    %46 = arith.mulf %45, %3 : vector<1x128xf32>
    %47 = vector.broadcast %46 : vector<1x128xf32> to vector<8x128xf32>
    %48 = arith.mulf %37, %47 : vector<8x128xf32>
    %49 = vector.broadcast %4 : vector<1x128xf32> to vector<8x128xf32>
    %50 = arith.addf %48, %49 : vector<8x128xf32>
    %cst_18 = arith.constant 0.000000e+00 : f32
    %51 = vector.broadcast %cst_18 : f32 to vector<8x128xf32>
    %52 = arith.maximumf %50, %51 : vector<8x128xf32>
    %c0_19 = arith.constant 0 : index
    %c256 = arith.constant 256 : index
    %53 = vector.load %arg1[%c0_19, %c256] : memref<128x384xf32, #tpu.memory_space<vmem>>, vector<128x128xf32>
    %cst_20 = arith.constant dense<0.000000e+00> : vector<8x128xf32>
    %54 = tpu.matmul %52, %53, %cst_20 {dimension_numbers = #tpu.dot_dimension_numbers<[1], [0], [0], [1], [0, 0, 1, 1], [], []>} : vector<8x128xf32>, vector<128x128xf32>, vector<8x128xf32> -> vector<8x128xf32>
    %55 = vector.broadcast %5 : vector<1x128xf32> to vector<8x128xf32>
    %56 = arith.addf %54, %55 : vector<8x128xf32>
    %c0_21 = arith.constant 0 : index
    %c0_22 = arith.constant 0 : index
    %57 = vector.load %arg3[%c0_21, %c0_22] : memref<8x128xf32, #tpu.memory_space<vmem>>, vector<8x128xf32>
    tpu.vector_store %arg3[%c0_21, %c0_22], %56 {strides = array<i32>} : memref<8x128xf32, #tpu.memory_space<vmem>>, vector<8x128xf32>,
    return
  }
}

</mosaic_0001>

<llo_original>
// kernel: r_forward.1
$region0: #{r_forward.1}
  #allocation0 [shape = 'u32[]', space=smem, size = 0x4, offset = 0x4, fixed_abs, tag = 'smem constant byte address 0x4 - core index']
  #allocation1 [shape = 'u32[144,128]{1,0:T(1,128)}', space=vmem, size = 0x12000, scoped, tag = 'internal scratch']
  %s0 = inlined_call_operand.vmem [shape: f32[8,128], index: 0, kind: input, shape index: {}]
  %s1 = inlined_call_operand.hbm [shape: f32[128,384], index: 1, kind: input, shape index: {}]
  %s2 = inlined_call_operand.vmem [shape: f32[8,128], index: 2, kind: input, shape index: {}]
  %s3 = inlined_call_operand.vmem [shape: f32[8,128], index: 3, kind: output, shape index: {}]
  %s4 = sld [smem:[#allocation0]]
  $region26: #{r_forward.1} parent=0
    _
  %s6 = ssub.s32 1, %s4
  %s7 = scalar_select 0, %s6, %s4
  $region1: #{r_forward.1} parent=0
    #allocation2 [shape = 'u8[196608]{0}', space=vmem, size = 0x30000, scoped, tag = 'input window, operand 1, single buffered']
    #allocation3 [shape = 's32[1]{0}', space=sflag, size = 0x4, scoped, tag = 'scoped memory for r_forward.1']
    %8 = vsyncpa [#allocation3], 0
    // Predicated region
    $region2: #{r_forward.1} parent=1 // pred_check
      _
    $region3: #{r_forward.1} parent=1 // pred_check_branch
      %10 = sbr.rel (0) target = $region5
    $region4: #{r_forward.1} parent=1 // pred_region
      _
    $region5: #{r_forward.1} parent=1 // pred_fallthru
      _
    // Predicated region
    $region6: #{r_forward.1} parent=1 // pred_check
      _
    $region7: #{r_forward.1} parent=1 // pred_check_branch
      %12 = sbr.rel (0) target = $region9
    $region8: #{r_forward.1} parent=1 // pred_region
      %s14 = ssub.s32 6144, 6144
      %15 = vsyncadd [#allocation3], %s14
      %s16 = sshll.u32 [#allocation2], 4
      %s17 = int_to_ptr.vmem [resolvable:$true] %s16
      %22 = dma.hbm_to_vmem [thread:$0]  %s1, 6144, %s17, [#allocation3], 384, 384, 24
    $region9: #{r_forward.1} parent=1 // pred_fallthru
      _
    // Predicated region
    $region10: #{r_forward.1} parent=1 // pred_check
      _
    $region11: #{r_forward.1} parent=1 // pred_check_branch
      %24 = sbr.rel (0) target = $region13
    $region12: #{r_forward.1} parent=1 // pred_region
      _
    $region13: #{r_forward.1} parent=1 // pred_fallthru
      _
    // Predicated region
    $region14: #{r_forward.1} parent=1 // pred_check
      _
    $region15: #{r_forward.1} parent=1 // pred_check_branch
      %26 = sbr.rel (0) target = $region17
    $region16: #{r_forward.1} parent=1 // pred_region
      %27 = dma.done [#allocation3], 6144
    $region17: #{r_forward.1} parent=1 // pred_fallthru
      _
    %v28 = vld [vmem:[%s2] sm:$0xff]
    %v29 = vld [vmem:[%s0] sm:$0xff]
    %v30 = vld [vmem:[#allocation2] sm:$0xff]
    %v31 = vld [vmem:[#allocation2 + $0x18] sm:$0xff]
    %v32 = vld [vmem:[#allocation2 + $0x30] sm:$0xff]
    %v33 = vld [vmem:[#allocation2 + $0x48] sm:$0xff]
    %v34 = vld [vmem:[#allocation2 + $0x60] sm:$0xff]
    %v35 = vld [vmem:[#allocation2 + $0x78] sm:$0xff]
    %v36 = vld [vmem:[#allocation2 + $0x90] sm:$0xff]
    %v37 = vld [vmem:[#allocation2 + $0xa8] sm:$0xff]
    %v38 = vld [vmem:[#allocation2 + $0xc0] sm:$0xff]
    %v39 = vld [vmem:[#allocation2 + $0xd8] sm:$0xff]
    %v40 = vld [vmem:[#allocation2 + $0xf0] sm:$0xff]
    %v41 = vld [vmem:[#allocation2 + $0x108] sm:$0xff]
    %v42 = vld [vmem:[#allocation2 + $0x120] sm:$0xff]
    %v43 = vld [vmem:[#allocation2 + $0x138] sm:$0xff]
    %v44 = vld [vmem:[#allocation2 + $0x150] sm:$0xff]
    %v45 = vld [vmem:[#allocation2 + $0x168] sm:$0xff]
    %46 = vmatprep.subr.mxu0 0.0
    %47 = vmatpush1.msra.mxu0 %v45
    %48 = vmatprep.subr.mxu0 0.0
    %49 = vmatpush1.msra.mxu0 %v44
    %50 = vmatprep.subr.mxu0 0.0
    %51 = vmatpush1.msra.mxu0 %v43
    %52 = vmatprep.subr.mxu0 0.0
    %53 = vmatpush1.msra.mxu0 %v42
    %54 = vmatprep.subr.mxu0 0.0
    %55 = vmatpush1.msra.mxu0 %v41
    %56 = vmatprep.subr.mxu0 0.0
    %57 = vmatpush1.msra.mxu0 %v40
    %58 = vmatprep.subr.mxu0 0.0
    %59 = vmatpush1.msra.mxu0 %v39
    %60 = vmatprep.subr.mxu0 0.0
    %61 = vmatpush1.msra.mxu0 %v38
    %62 = vmatprep.subr.mxu0 0.0
    %63 = vmatpush1.msra.mxu0 %v37
    %64 = vmatprep.subr.mxu0 0.0
    %65 = vmatpush1.msra.mxu0 %v36
    %66 = vmatprep.subr.mxu0 0.0
    %67 = vmatpush1.msra.mxu0 %v35
    %68 = vmatprep.subr.mxu0 0.0
    %69 = vmatpush1.msra.mxu0 %v34
    %70 = vmatprep.subr.mxu0 0.0
    %71 = vmatpush1.msra.mxu0 %v33
    %72 = vmatprep.subr.mxu0 0.0
    %73 = vmatpush1.msra.mxu0 %v32
    %74 = vmatprep.subr.mxu0 0.0
    %75 = vmatpush1.msra.mxu0 %v31
    %76 = vmatprep.subr.mxu0 0.0
    %77 = vmatpush1.msra.mxu0 %v30
    %78 = vmatprep.subr.mxu0 0.0
    %79 = vmatpush2.msra.mxu0 0.0
    %80 = vmatprep.subr.mxu0 0.0
    %81 = vmatpush2.msra.mxu0 0.0
    %82 = vmatprep.subr.mxu0 0.0
    %83 = vmatpush2.msra.mxu0 0.0
    %84 = vmatprep.subr.mxu0 0.0
    %85 = vmatpush2.msra.mxu0 0.0
    %86 = vmatprep.subr.mxu0 0.0
    %87 = vmatpush2.msra.mxu0 0.0
    %88 = vmatprep.subr.mxu0 0.0
    %89 = vmatpush2.msra.mxu0 0.0
    %90 = vmatprep.subr.mxu0 0.0
    %91 = vmatpush2.msra.mxu0 0.0
    %92 = vmatprep.subr.mxu0 0.0
    %93 = vmatpush2.msra.mxu0 0.0
    %94 = vmatprep.subr.mxu0 0.0
    %95 = vmatpush2.msra.mxu0 0.0
    %96 = vmatprep.subr.mxu0 0.0
    %97 = vmatpush2.msra.mxu0 0.0
    %98 = vmatprep.subr.mxu0 0.0
    %99 = vmatpush2.msra.mxu0 0.0
    %100 = vmatprep.subr.mxu0 0.0
    %101 = vmatpush2.msra.mxu0 0.0
    %102 = vmatprep.subr.mxu0 0.0
    %103 = vmatpush2.msra.mxu0 0.0
    %104 = vmatprep.subr.mxu0 0.0
    %105 = vmatpush2.msra.mxu0 0.0
    %106 = vmatprep.subr.mxu0 0.0
    %107 = vmatpush2.msra.mxu0 0.0
    %108 = vmatprep.subr.mxu0 0.0
    %109 = vmatpush2.msra.mxu0 0.0
    %110 = vmatprep.mubr.f32.mxu0 0.0
    %111 = vmatmul.mubr.f32.gmra.mxu0 %v29
    %v112 = vpop.f32.mrf.mxu0
    %v113 = vadd.f32 0.0, %v112
    %v114 = vpop.f32.mrf.mxu0
    %115 = vdwg.mxu0
    %v116 = vrot.slane %v113, 4
    %v117 = vadd.f32 %v113, %v116
    %v118 = vrot.slane %v117, 2
    %v119 = vadd.f32 %v117, %v118
    %v120 = vrot.slane %v119, 1
    %v121 = vadd.f32 %v119, %v120
    %v122 = vrcp.pop 8.0
    %v123 = vmul.f32 %v121, %v122
    %v124 = vsub.f32 %v113, %v123
    %v125 = vmul.f32 %v124, %v124
    %v126 = vrot.slane %v125, 4
    %v127 = vadd.f32 %v125, %v126
    %v128 = vrot.slane %v127, 2
    %v129 = vadd.f32 %v127, %v128
    %v130 = vrot.slane %v129, 1
    %v131 = vadd.f32 %v129, %v130
    %v132 = vmul.f32 %v131, %v122
    %v133 = vadd.f32 %v132, 1e-05
    %v134 = vrsqrt.pop %v133
    %v135 = vmul.f32 %v134, %v28
    %v136 = vlaneseq
    %v137 = vshrl.u32 %v136, 7
    %v138 = vsub.s32 0, %v137
    %v139 = vrot.slane %v135, %v138
    %v140 = vmul.f32 %v124, %v139
    %v141 = vlaneseq
    %v142 = vshrl.u32 %v141, 7
    %v143 = vsub.s32 1, %v142
    %v144 = vrot.slane %v28, %v143
    %v145 = vadd.f32 %v140, %v144
    %v146 = vmax.f32 %v145, 0.0
    %v147 = vld [vmem:[#allocation2 + $0x8] sm:$0xff]
    %v148 = vld [vmem:[#allocation2 + $0x20] sm:$0xff]
    %v149 = vld [vmem:[#allocation2 + $0x38] sm:$0xff]
    %v150 = vld [vmem:[#allocation2 + $0x50] sm:$0xff]
    %v151 = vld [vmem:[#allocation2 + $0x68] sm:$0xff]
    %v152 = vld [vmem:[#allocation2 + $0x80] sm:$0xff]
    %v153 = vld [vmem:[#allocation2 + $0x98] sm:$0xff]
    %v154 = vld [vmem:[#allocation2 + $0xb0] sm:$0xff]
    %v155 = vld [vmem:[#allocation2 + $0xc8] sm:$0xff]
    %v156 = vld [vmem:[#allocation2 + $0xe0] sm:$0xff]
    %v157 = vld [vmem:[#allocation2 + $0xf8] sm:$0xff]
    %v158 = vld [vmem:[#allocation2 + $0x110] sm:$0xff]
    %v159 = vld [vmem:[#allocation2 + $0x128] sm:$0xff]
    %v160 = vld [vmem:[#allocation2 + $0x140] sm:$0xff]
    %v161 = vld [vmem:[#allocation2 + $0x158] sm:$0xff]
    %v162 = vld [vmem:[#allocation2 + $0x170] sm:$0xff]
    %163 = vmatprep.subr.mxu0 0.0
    %164 = vmatpush1.msra.mxu0 %v162
    %165 = vmatprep.subr.mxu0 0.0
    %166 = vmatpush1.msra.mxu0 %v161
    %167 = vmatprep.subr.mxu0 0.0
    %168 = vmatpush1.msra.mxu0 %v160
    %169 = vmatprep.subr.mxu0 0.0
    %170 = vmatpush1.msra.mxu0 %v159
    %171 = vmatprep.subr.mxu0 0.0
    %172 = vmatpush1.msra.mxu0 %v158
    %173 = vmatprep.subr.mxu0 0.0
    %174 = vmatpush1.msra.mxu0 %v157
    %175 = vmatprep.subr.mxu0 0.0
    %176 = vmatpush1.msra.mxu0 %v156
    %177 = vmatprep.subr.mxu0 0.0
    %178 = vmatpush1.msra.mxu0 %v155
    %179 = vmatprep.subr.mxu0 0.0
    %180 = vmatpush1.msra.mxu0 %v154
    %181 = vmatprep.subr.mxu0 0.0
    %182 = vmatpush1.msra.mxu0 %v153
    %183 = vmatprep.subr.mxu0 0.0
    %184 = vmatpush1.msra.mxu0 %v152
    %185 = vmatprep.subr.mxu0 0.0
    %186 = vmatpush1.msra.mxu0 %v151
    %187 = vmatprep.subr.mxu0 0.0
    %188 = vmatpush1.msra.mxu0 %v150
    %189 = vmatprep.subr.mxu0 0.0
    %190 = vmatpush1.msra.mxu0 %v149
    %191 = vmatprep.subr.mxu0 0.0
    %192 = vmatpush1.msra.mxu0 %v148
    %193 = vmatprep.subr.mxu0 0.0
    %194 = vmatpush1.msra.mxu0 %v147
    %195 = vmatprep.subr.mxu0 0.0
    %196 = vmatpush2.msra.mxu0 0.0
    %197 = vmatprep.subr.mxu0 0.0
    %198 = vmatpush2.msra.mxu0 0.0
    %199 = vmatprep.subr.mxu0 0.0
    %200 = vmatpush2.msra.mxu0 0.0
    %201 = vmatprep.subr.mxu0 0.0
    %202 = vmatpush2.msra.mxu0 0.0
    %203 = vmatprep.subr.mxu0 0.0
    %204 = vmatpush2.msra.mxu0 0.0
    %205 = vmatprep.subr.mxu0 0.0
    %206 = vmatpush2.msra.mxu0 0.0
    %207 = vmatprep.subr.mxu0 0.0
    %208 = vmatpush2.msra.mxu0 0.0
    %209 = vmatprep.subr.mxu0 0.0
    %210 = vmatpush2.msra.mxu0 0.0
    %211 = vmatprep.subr.mxu0 0.0
    %212 = vmatpush2.msra.mxu0 0.0
    %213 = vmatprep.subr.mxu0 0.0
    %214 = vmatpush2.msra.mxu0 0.0
    %215 = vmatprep.subr.mxu0 0.0
    %216 = vmatpush2.msra.mxu0 0.0
    %217 = vmatprep.subr.mxu0 0.0
    %218 = vmatpush2.msra.mxu0 0.0
    %219 = vmatprep.subr.mxu0 0.0
    %220 = vmatpush2.msra.mxu0 0.0
    %221 = vmatprep.subr.mxu0 0.0
    %222 = vmatpush2.msra.mxu0 0.0
    %223 = vmatprep.subr.mxu0 0.0
    %224 = vmatpush2.msra.mxu0 0.0
    %225 = vmatprep.subr.mxu0 0.0
    %226 = vmatpush2.msra.mxu0 0.0
    %227 = vmatprep.mubr.f32.mxu0 0.0
    %228 = vmatmul.mubr.f32.gmra.mxu0 %v146
    %v229 = vpop.f32.mrf.mxu0
    %v230 = vadd.f32 0.0, %v229
    %v231 = vpop.f32.mrf.mxu0
    %232 = vdwg.mxu0
    %v233 = vrot.slane %v230, 4
    %v234 = vadd.f32 %v230, %v233
    %v235 = vrot.slane %v234, 2
    %v236 = vadd.f32 %v234, %v235
    %v237 = vrot.slane %v236, 1
    %v238 = vadd.f32 %v236, %v237
    %v239 = vmul.f32 %v238, %v122
    %v240 = vsub.f32 %v230, %v239
    %v241 = vmul.f32 %v240, %v240
    %v242 = vrot.slane %v241, 4
    %v243 = vadd.f32 %v241, %v242
    %v244 = vrot.slane %v243, 2
    %v245 = vadd.f32 %v243, %v244
    %v246 = vrot.slane %v245, 1
    %v247 = vadd.f32 %v245, %v246
    %v248 = vmul.f32 %v247, %v122
    %v249 = vadd.f32 %v248, 1e-05
    %v250 = vrsqrt.pop %v249
    %v251 = vmul.f32 %v250, %v28
    %v252 = vlaneseq
    %v253 = vshrl.u32 %v252, 7
    %v254 = vsub.s32 2, %v253
    %v255 = vrot.slane %v251, %v254
    %v256 = vmul.f32 %v240, %v255
    %v257 = vlaneseq
    %v258 = vshrl.u32 %v257, 7
    %v259 = vsub.s32 3, %v258
    %v260 = vrot.slane %v28, %v259
    %v261 = vadd.f32 %v256, %v260
    %v262 = vmax.f32 %v261, 0.0
    %v263 = vld [vmem:[#allocation2 + $0x10] sm:$0xff]
    %v264 = vld [vmem:[#allocation2 + $0x28] sm:$0xff]
    %v265 = vld [vmem:[#allocation2 + $0x40] sm:$0xff]
    %v266 = vld [vmem:[#allocation2 + $0x58] sm:$0xff]
    %v267 = vld [vmem:[#allocation2 + $0x70] sm:$0xff]
    %v268 = vld [vmem:[#allocation2 + $0x88] sm:$0xff]
    %v269 = vld [vmem:[#allocation2 + $0xa0] sm:$0xff]
    %v270 = vld [vmem:[#allocation2 + $0xb8] sm:$0xff]
    %v271 = vld [vmem:[#allocation2 + $0xd0] sm:$0xff]
    %v272 = vld [vmem:[#allocation2 + $0xe8] sm:$0xff]
    %v273 = vld [vmem:[#allocation2 + $0x100] sm:$0xff]
    %v274 = vld [vmem:[#allocation2 + $0x118] sm:$0xff]
    %v275 = vld [vmem:[#allocation2 + $0x130] sm:$0xff]
    %v276 = vld [vmem:[#allocation2 + $0x148] sm:$0xff]
    %v277 = vld [vmem:[#allocation2 + $0x160] sm:$0xff]
    %v278 = vld [vmem:[#allocation2 + $0x178] sm:$0xff]
    %v279 = vlaneseq
    %v280 = vshrl.u32 %v279, 7
    %v281 = vsub.s32 4, %v280
    %v282 = vrot.slane %v28, %v281
    %283 = vmatprep.subr.mxu0 0.0
    %284 = vmatpush1.msra.mxu0 %v278
    %285 = vmatprep.subr.mxu0 0.0
    %286 = vmatpush1.msra.mxu0 %v277
    %287 = vmatprep.subr.mxu0 0.0
    %288 = vmatpush1.msra.mxu0 %v276
    %289 = vmatprep.subr.mxu0 0.0
    %290 = vmatpush1.msra.mxu0 %v275
    %291 = vmatprep.subr.mxu0 0.0
    %292 = vmatpush1.msra.mxu0 %v274
    %293 = vmatprep.subr.mxu0 0.0
    %294 = vmatpush1.msra.mxu0 %v273
    %295 = vmatprep.subr.mxu0 0.0
    %296 = vmatpush1.msra.mxu0 %v272
    %297 = vmatprep.subr.mxu0 0.0
    %298 = vmatpush1.msra.mxu0 %v271
    %299 = vmatprep.subr.mxu0 0.0
    %300 = vmatpush1.msra.mxu0 %v270
    %301 = vmatprep.subr.mxu0 0.0
    %302 = vmatpush1.msra.mxu0 %v269
    %303 = vmatprep.subr.mxu0 0.0
    %304 = vmatpush1.msra.mxu0 %v268
    %305 = vmatprep.subr.mxu0 0.0
    %306 = vmatpush1.msra.mxu0 %v267
    %307 = vmatprep.subr.mxu0 0.0
    %308 = vmatpush1.msra.mxu0 %v266
    %309 = vmatprep.subr.mxu0 0.0
    %310 = vmatpush1.msra.mxu0 %v265
    %311 = vmatprep.subr.mxu0 0.0
    %312 = vmatpush1.msra.mxu0 %v264
    %313 = vmatprep.subr.mxu0 0.0
    %314 = vmatpush1.msra.mxu0 %v263
    %315 = vmatprep.subr.mxu0 0.0
    %316 = vmatpush2.msra.mxu0 0.0
    %317 = vmatprep.subr.mxu0 0.0
    %318 = vmatpush2.msra.mxu0 0.0
    %319 = vmatprep.subr.mxu0 0.0
    %320 = vmatpush2.msra.mxu0 0.0
    %321 = vmatprep.subr.mxu0 0.0
    %322 = vmatpush2.msra.mxu0 0.0
    %323 = vmatprep.subr.mxu0 0.0
    %324 = vmatpush2.msra.mxu0 0.0
    %325 = vmatprep.subr.mxu0 0.0
    %326 = vmatpush2.msra.mxu0 0.0
    %327 = vmatprep.subr.mxu0 0.0
    %328 = vmatpush2.msra.mxu0 0.0
    %329 = vmatprep.subr.mxu0 0.0
    %330 = vmatpush2.msra.mxu0 0.0
    %331 = vmatprep.subr.mxu0 0.0
    %332 = vmatpush2.msra.mxu0 0.0
    %333 = vmatprep.subr.mxu0 0.0
    %334 = vmatpush2.msra.mxu0 0.0
    %335 = vmatprep.subr.mxu0 0.0
    %336 = vmatpush2.msra.mxu0 0.0
    %337 = vmatprep.subr.mxu0 0.0
    %338 = vmatpush2.msra.mxu0 0.0
    %339 = vmatprep.subr.mxu0 0.0
    %340 = vmatpush2.msra.mxu0 0.0
    %341 = vmatprep.subr.mxu0 0.0
    %342 = vmatpush2.msra.mxu0 0.0
    %343 = vmatprep.subr.mxu0 0.0
    %344 = vmatpush2.msra.mxu0 0.0
    %345 = vmatprep.subr.mxu0 0.0
    %346 = vmatpush2.msra.mxu0 0.0
    %347 = vmatprep.mubr.f32.mxu0 0.0
    %348 = vmatmul.mubr.f32.gmra.mxu0 %v262
    %v349 = vpop.f32.mrf.mxu0
    %v350 = vadd.f32 %v282, %v349
    %v351 = vpop.f32.mrf.mxu0
    %352 = vdwg.mxu0
    %353 = vst [vmem:[%s3] sm:$0xff] %v350
    // Predicated region
    $region18: #{r_forward.1} parent=1 // pred_check
      _
    $region19: #{r_forward.1} parent=1 // pred_check_branch
      %355 = sbr.rel (0) target = $region21
    $region20: #{r_forward.1} parent=1 // pred_region
      _
    $region21: #{r_forward.1} parent=1 // pred_fallthru
      _
    // Predicated region
    $region22: #{r_forward.1} parent=1 // pred_check
      _
    $region23: #{r_forward.1} parent=1 // pred_check_branch
      %357 = sbr.rel (0) target = $region25
    $region24: #{r_forward.1} parent=1 // pred_region
      _
    $region25: #{r_forward.1} parent=1 // pred_fallthru
      _
    %358 = vsyncpa [#allocation3], 1

</llo_original>
